<compile_context>
chip_gen: v7x
topology: tpu7x:2x2x1
jax: 0.10.0
libtpu: 0.0.40
codegen_flags: <defaults>
</compile_context>

<pallas_src>
import functools

import jax
import jax.numpy as jnp
from jax.experimental import pallas as pl
from jax.experimental.pallas import tpu as pltpu


_MiB = 1024 * 1024
# Whole-table-in-VMEM path budget: conservative vs v7x's 64 MiB per-TC VMEM.
_VMEM_TABLE_BUDGET = 48 * _MiB
# Below this much gathered data, an XLA gather beats any kernel launch.
_SMALL_BYPASS_BYTES = 256 * 1024


def _rows_per_group(dtype):
    # Full packed sublane tile: 8 rows for 4-byte, 16 for 2-byte, 32 for 1-byte.
    return max(8, 32 // jnp.dtype(dtype).itemsize)


# ---------------------------------------------------------------------------
# Path A: whole table staged in VMEM, single grid step, in-kernel gather loop.
# ---------------------------------------------------------------------------
def _vmem_table_kernel(ids_ref, table_ref, out_ref):
    # ids_ref:   SMEM (B_pad,) int32     -- scalar-prefetched class ids
    # table_ref: VMEM (n_classes, E)     -- whole embedding table (one DMA)
    # out_ref:   VMEM (B_pad, E)
    @pl.loop(0, out_ref.shape[0])
    def _(b):
        row = ids_ref[b]
        out_ref[pl.ds(b, 1), :] = table_ref[pl.ds(row, 1), :]


def _lookup_vmem_table(ids, emb_table):
    B = ids.shape[0]
    n_classes, embed_dim = emb_table.shape
    dtype = emb_table.dtype
    itemsize = jnp.dtype(dtype).itemsize

    group = _rows_per_group(dtype)
    b_pad = pl.cdiv(B, group) * group
    ids_p = jnp.pad(ids, (0, b_pad - B))  # pad rows gather class 0 (valid), sliced off below

    table_bytes = n_classes * embed_dim * itemsize
    out_bytes = b_pad * embed_dim * itemsize
    # Be pessimistic about double-buffering of the blocked operands.
    vmem_need = 2 * (table_bytes + out_bytes) + _MiB
    vmem_limit = int(min(_VMEM_TABLE_BUDGET + 8 * _MiB, max(vmem_need, 32 * _MiB)))

    grid_spec = pltpu.PrefetchScalarGridSpec(
        num_scalar_prefetch=1,
        grid=(1,),
        in_specs=[
            pl.BlockSpec((n_classes, embed_dim), lambda i, ids_sref: (0, 0)),
        ],
        out_specs=pl.BlockSpec((b_pad, embed_dim), lambda i, ids_sref: (0, 0)),
    )

    cost = pl.CostEstimate(
        flops=0,
        transcendentals=0,
        bytes_accessed=table_bytes + 2 * out_bytes + b_pad * 4,
    )

    out = pl.pallas_call(
        _vmem_table_kernel,
        out_shape=jax.ShapeDtypeStruct((b_pad, embed_dim), dtype),
        grid_spec=grid_spec,
        compiler_params=pltpu.CompilerParams(
            dimension_semantics=("arbitrary",),
            vmem_limit_bytes=vmem_limit,
        ),
        cost_estimate=cost,
    )(ids_p, emb_table)
    return out[:B]


# ---------------------------------------------------------------------------
# Path B: table stays in HBM; R rows gathered per grid step via manual DMAs.
# ---------------------------------------------------------------------------
def _row_gather_kernel(rows_per_step, ids_ref, emb_hbm, out_ref, row_buf, sems):
    # ids_ref:  SMEM (B_pad,) int32        -- scalar-prefetched class ids
    # emb_hbm:  HBM  (n_classes, E)        -- never staged wholesale
    # out_ref:  VMEM (rows_per_step, E)
    # row_buf:  VMEM (rows_per_step, E) scratch
    # sems:     DMA semaphores (rows_per_step,)
    base = pl.program_id(0) * rows_per_step
    # Issue all row DMAs first so they overlap, then wait on each.
    for r in range(rows_per_step):
        pltpu.make_async_copy(
            emb_hbm.at[ids_ref[base + r]], row_buf.at[r], sems.at[r]
        ).start()
    for r in range(rows_per_step):
        pltpu.make_async_copy(
            emb_hbm.at[ids_ref[base + r]], row_buf.at[r], sems.at[r]
        ).wait()
    out_ref[...] = row_buf[...]


def _lookup_row_gather(ids, emb_table):
    B = ids.shape[0]
    n_classes, embed_dim = emb_table.shape
    dtype = emb_table.dtype
    itemsize = jnp.dtype(dtype).itemsize

    rows = _rows_per_group(dtype)
    b_pad = pl.cdiv(B, rows) * rows
    ids_p = jnp.pad(ids, (0, b_pad - B))  # pad rows gather class 0, sliced off below

    grid_spec = pltpu.PrefetchScalarGridSpec(
        num_scalar_prefetch=1,
        grid=(b_pad // rows,),
        in_specs=[pl.BlockSpec(memory_space=pl.ANY)],  # raw HBM ref, manual DMA
        out_specs=pl.BlockSpec((rows, embed_dim), lambda g, ids_sref: (g, 0)),
        scratch_shapes=[
            pltpu.VMEM((rows, embed_dim), dtype),
            pltpu.SemaphoreType.DMA((rows,)),
        ],
    )

    cost = pl.CostEstimate(
        flops=0,
        transcendentals=0,
        bytes_accessed=2 * b_pad * embed_dim * itemsize + b_pad * 4,
    )

    out = pl.pallas_call(
        functools.partial(_row_gather_kernel, rows),
        out_shape=jax.ShapeDtypeStruct((b_pad, embed_dim), dtype),
        grid_spec=grid_spec,
        compiler_params=pltpu.CompilerParams(
            dimension_semantics=("parallel",),
        ),
        cost_estimate=cost,
    )(ids_p, emb_table)
    return out[:B]


# ---------------------------------------------------------------------------
# Wrapper
# ---------------------------------------------------------------------------
def class_embedding_lookup(class_ids, emb_table, *, method="auto"):
    """Pallas equivalent of ClassEmbedder.forward's hot path.

    class_ids: (B,) integer class ids
    emb_table: (n_classes, embed_dim) float table (nn.Embedding.weight layout)
    method:    "auto" | "vmem_table" | "row_gather" | "xla"
    returns:   (B, 1, embed_dim) with emb_table's dtype
    """
    B = class_ids.shape[0]
    n_classes, embed_dim = emb_table.shape
    itemsize = jnp.dtype(emb_table.dtype).itemsize

    # Clamp so a bad id can never drive an out-of-bounds gather DMA.
    # NOTE: PyTorch nn.Embedding raises on out-of-range ids; we clamp instead.
    ids = jnp.clip(class_ids.astype(jnp.int32), 0, n_classes - 1)

    if method == "auto":
        table_bytes = n_classes * embed_dim * itemsize
        out_bytes = B * embed_dim * itemsize
        if out_bytes < _SMALL_BYPASS_BYTES:
            method = "xla"
        elif 2 * (table_bytes + out_bytes) + _MiB <= _VMEM_TABLE_BUDGET:
            method = "vmem_table"
        else:
            method = "row_gather"

    if method == "xla":
        return emb_table[ids][:, None, :]
    if method == "vmem_table":
        out2d = _lookup_vmem_table(ids, emb_table)
    elif method == "row_gather":
        out2d = _lookup_row_gather(ids, emb_table)
    else:
        raise ValueError(f"unknown method: {method}")

    # PyTorch returns (B, 1, embed_dim); the reshape is metadata-only.
    return out2d[:, None, :]


class ClassEmbedder:
    """JAX/Pallas port of the PyTorch ClassEmbedder."""

    def __init__(self, embed_dim, n_classes=1000, key='class', *, rng=None,
                 dtype=jnp.float32):
        self.key = key
        self.n_classes = n_classes
        if rng is None:
            rng = jax.random.PRNGKey(0)
        # nn.Embedding default init: weight ~ N(0, 1)
        self.embedding_weight = jax.random.normal(
            rng, (n_classes, embed_dim), dtype=jnp.float32
        ).astype(dtype)

    def __call__(self, batch, key=None, *, method="auto"):
        if key is None:
            key = self.key
        c = batch[key]  # (B,) class ids; the [:, None] is fused into the wrapper output
        return class_embedding_lookup(c, self.embedding_weight, method=method)


if __name__ == "__main__":
    B = 12            # not a multiple of 8 -> exercises padding
    embed_dim = 256
    n_classes = 40

    root = jax.random.PRNGKey(0)
    k_weights, k_ids = jax.random.split(root)

    embedder = ClassEmbedder(embed_dim, n_classes=n_classes, key='class',
                             rng=k_weights)

    class_ids = jax.random.randint(k_ids, (B,), 0, n_classes, dtype=jnp.int32)
    batch = {'class': class_ids}

    # Reference: plain JAX gather with [:, None]
    ref = embedder.embedding_weight[class_ids][:, None, :]

    # 1) Whole-table-in-VMEM kernel path.
    out_vmem = jax.block_until_ready(embedder(batch, method="vmem_table"))
    assert out_vmem.shape == (B, 1, embed_dim), out_vmem.shape
    assert out_vmem.dtype == jnp.float32, out_vmem.dtype
    assert jnp.allclose(out_vmem, ref), "vmem_table path mismatch vs reference"

    # 2) Manual-DMA row-gather kernel path (used when the table exceeds VMEM).
    out_gather = jax.block_until_ready(embedder(batch, method="row_gather"))
    assert out_gather.shape == (B, 1, embed_dim), out_gather.shape
    assert jnp.allclose(out_gather, ref), "row_gather path mismatch vs reference"

    # 3) Auto path (this tiny demo size takes the XLA-gather bypass).
    out_auto = jax.block_until_ready(embedder(batch))
    assert jnp.allclose(out_auto, ref), "auto path mismatch vs reference"

    print("KERNEL_OK")
</pallas_src>

<mosaic_0001>
module attributes {stable_mosaic.version = 11 : i64} {
  func.func @_vmem_table_kernel(%arg0: i32, %arg1: memref<16xi32, #tpu.memory_space<smem>>, %arg2: memref<40x256xf32, #tpu.memory_space<vmem>>, %arg3: memref<16x256xf32, #tpu.memory_space<vmem>>) attributes {dimension_semantics = [#tpu.dimension_semantics<arbitrary>], iteration_bounds = array<i64: 1>, scalar_prefetch = 1 : i64, scratch_operands = 0 : i64, tpu.core_type = #tpu.core_type<tc>, window_params = [{pipeline_mode = #tpu.pipeline_mode<synchronous>, transform_indices = @transform_0, window_bounds = array<i64: 40, 256>}, {pipeline_mode = #tpu.pipeline_mode<synchronous>, transform_indices = @transform_1, window_bounds = array<i64: 16, 256>}]} {
    %c0_i32 = arith.constant 0 : i32
    %c16_i32 = arith.constant 16 : i32
    %0 = arith.addi %c0_i32, %c16_i32 : i32
    %c1_i32 = arith.constant 1 : i32
    scf.for %arg4 = %c0_i32 to %0 step %c1_i32  : i32 {
      %c1_i32_1 = arith.constant 1 : i32
      %1 = arith.muli %arg4, %c1_i32_1 : i32
      %c0_i32_2 = arith.constant 0 : i32
      %2 = arith.addi %c0_i32_2, %1 : i32
      %3 = arith.index_cast %2 : i32 to index
      %4 = memref.load %arg1[%3] : memref<16xi32, #tpu.memory_space<smem>>
      %5 = arith.index_cast %4 : i32 to index
      %c0 = arith.constant 0 : index
      %6 = vector.load %arg2[%5, %c0] : memref<40x256xf32, #tpu.memory_space<vmem>>, vector<1x256xf32>
      %7 = arith.index_cast %2 : i32 to index
      %c0_3 = arith.constant 0 : index
      %8 = vector.load %arg3[%7, %c0_3] : memref<16x256xf32, #tpu.memory_space<vmem>>, vector<1x256xf32>
      tpu.vector_store %arg3[%7, %c0_3], %6 {strides = array<i32>} : memref<16x256xf32, #tpu.memory_space<vmem>>, vector<1x256xf32>,
    }
    %c16_i32_0 = arith.constant 16 : i32
    return
  }
  func.func @transform_0(%arg0: i32, %arg1: memref<16xi32, #tpu.memory_space<smem>>) -> (i32, i32) {
    %c0_i32 = arith.constant 0 : i32
    %c0_i32_0 = arith.constant 0 : i32
    %c0_i32_1 = arith.constant 0 : i32
    return %c0_i32, %c0_i32_0 : i32, i32
  }
  func.func @transform_1(%arg0: i32, %arg1: memref<16xi32, #tpu.memory_space<smem>>) -> (i32, i32) {
    %c0_i32 = arith.constant 0 : i32
    %c0_i32_0 = arith.constant 0 : i32
    %c0_i32_1 = arith.constant 0 : i32
    return %c0_i32, %c0_i32_0 : i32, i32
  }
}

</mosaic_0001>

<llo_original>
// kernel: tpu_custom_call.1
$region0: #{tpu_custom_call.1}
  #allocation0 [shape = 'u32[]', space=smem, size = 0x4, offset = 0x4, fixed_abs, tag = 'smem constant byte address 0x4 - core index']
  #allocation1 [shape = 'u32[144,128]{1,0:T(1,128)}', space=vmem, size = 0x12000, scoped, tag = 'internal scratch']
  #allocation2 [shape = 's32[1]{0}', space=sflag, size = 0x4, scoped, tag = 'scoped memory for tpu_custom_call.1']
  #allocation3 [shape = 'u8[512]{0}', space=smem, size = 0x200, scoped, tag = 'prefetched SMEM operand 0']
  %s0 = inlined_call_operand.hbm [shape: s32[16], index: 0, kind: input, shape index: {}]
  %s1 = inlined_call_operand.hbm [shape: f32[40,256], index: 1, kind: input, shape index: {}]
  %s2 = inlined_call_operand.hbm [shape: f32[16,256], index: 2, kind: output, shape index: {}]
  %s3 = sld [smem:[#allocation0]]
  $region25: #{tpu_custom_call.1} parent=0
    _
  %s5 = ssub.s32 1, %s3
  %s6 = scalar_select 0, %s5, %s3
  %8 = dma.hbm_to_smem %s0, 16, [#allocation3], [#allocation2]
  %9 = dma.done [#allocation2], 16
  %10 = sfence
  $region1: #{tpu_custom_call.1} parent=0
    #allocation4 [shape = 'u8[40960]{0}', space=vmem, size = 0xa000, scoped, tag = 'input window, operand 1, single buffered']
    #allocation5 [shape = 's32[1]{0}', space=sflag, size = 0x4, scoped, tag = 'scoped memory for tpu_custom_call.1']
    #allocation6 [shape = 's32[1]{0}', space=sflag, size = 0x4, scoped, tag = 'scoped memory for tpu_custom_call.1']
    #allocation7 [shape = 'u8[16384]{0}', space=vmem, size = 0x4000, scoped, tag = 'output window, operand 0, single buffered']
    %11 = vsyncpa [#allocation5], 0
    %12 = vsyncpa [#allocation6], 0
    // Predicated region
    $region2: #{tpu_custom_call.1} parent=1 // pred_check
      _
    $region3: #{tpu_custom_call.1} parent=1 // pred_check_branch
      %14 = sbr.rel (0) target = $region5
    $region4: #{tpu_custom_call.1} parent=1 // pred_region
      %s16 = ssub.s32 1280, 1280
      %17 = vsyncadd [#allocation5], %s16
      %s18 = sshll.u32 [#allocation4], 4
      %s19 = int_to_ptr.vmem [resolvable:$true] %s18
      %24 = dma.hbm_to_vmem [thread:$0]  %s1, 1280, %s19, [#allocation5], 256, 256, 16
    $region5: #{tpu_custom_call.1} parent=1 // pred_fallthru
      _
    // Predicated region
    $region6: #{tpu_custom_call.1} parent=1 // pred_check
      _
    $region7: #{tpu_custom_call.1} parent=1 // pred_check_branch
      %26 = sbr.rel (0) target = $region9
    $region8: #{tpu_custom_call.1} parent=1 // pred_region
      %27 = dma.done [#allocation5], 1280
    $region9: #{tpu_custom_call.1} parent=1 // pred_fallthru
      _
    loop: start=0, step=1, limit=16
    $region10: #{tpu_custom_call.1} parent=1 // loop_pre_header
      _
    $region11: #{tpu_custom_call.1} parent=1 // loop_header
      %s29 = sphi 0, %s33
      %p30 = scmp.ge.s32.totalorder %s29, 16
    $region12: #{tpu_custom_call.1} parent=1 // loop_header_branch
      %32 = sbr.rel (%p30) target = $region16
    $region13: #{tpu_custom_call.1} parent=1 // loop_body
      %s34 = sld [smem:[#allocation3 + %s29]]
      %s35 = sshra.s32 %s34, 3
      %s36 = sand.u32 %s34, 7
      %s37 = sshra.s32 %s34, 3
      %s38 = sand.u32 %s34, 7
      %s39 = smul.u32 %s35, 2
      %s40 = smul.u32 %s39, 8
      %s41 = sadd.s32 %s40, %s38
      %s42 = scalar_lea.vmem [#allocation4], %s41
      %v43 = vld [vmem:[%s42] ss:$8 sm:$0x3]
      %v44 = vlaneseq
      %vm45 = vcmp.ge.s32.totalorder %v44, 0
      %vm46 = vcmp.lt.s32.totalorder %v44, 256
      %vm47 = vmand %vm45, %vm46
      %s48 = sshra.s32 %s29, 3
      %s49 = sand.u32 %s29, 7
      %s50 = sshra.s32 %s29, 3
      %s51 = sand.u32 %s29, 7
      %s52 = smul.u32 %s48, 2
      %s53 = smul.u32 %s52, 8
      %s54 = sadd.s32 %s53, %s51
      %s55 = scalar_lea.vmem [#allocation7], %s54
      %56 = vst.msk [vmem:[%s55] ss:$8 sm:$0x3] %vm47, %v43
      %57 = vst.msk [vmem:[%s55] ss:$8 sm:$0x0] %vm47, %v43
    $region14: #{tpu_custom_call.1} parent=1 // loop_footer
      %s33 = sadd.s32 1, %s29
    $region15: #{tpu_custom_call.1} parent=1 // loop_footer_branch
      %28 = sbr.rel target = $region11
    $region16: #{tpu_custom_call.1} parent=1 // loop_exit
      _
    // Predicated region
    $region17: #{tpu_custom_call.1} parent=1 // pred_check
      _
    $region18: #{tpu_custom_call.1} parent=1 // pred_check_branch
      %59 = sbr.rel (0) target = $region20
    $region19: #{tpu_custom_call.1} parent=1 // pred_region
      %s61 = ssub.s32 512, 512
      %62 = vsyncadd [#allocation6], %s61
      %s63 = sshll.u32 [#allocation7], 4
      %s64 = int_to_ptr.vmem [resolvable:$true] %s63
      %69 = dma.vmem_to_hbm [thread:$0]  %s64, 512, %s2, [#allocation6], 256, 256, 16
    $region20: #{tpu_custom_call.1} parent=1 // pred_fallthru
      _
    // Predicated region
    $region21: #{tpu_custom_call.1} parent=1 // pred_check
      _
    $region22: #{tpu_custom_call.1} parent=1 // pred_check_branch
      %71 = sbr.rel (0) target = $region24
    $region23: #{tpu_custom_call.1} parent=1 // pred_region
      %72 = dma.done [#allocation6], 512
    $region24: #{tpu_custom_call.1} parent=1 // pred_fallthru
      _
    %73 = vsyncpa [#allocation5], 1
    %74 = vsyncpa [#allocation6], 1

</llo_original>
